<compile_context>
chip_gen: v7x
topology: tpu7x:2x2x1
jax: 0.10.0
libtpu: 0.0.40
codegen_flags: <defaults>
</compile_context>

<pallas_src>
import functools

import jax
import jax.numpy as jnp
from jax.experimental import pallas as pl
from jax.experimental.pallas import tpu as pltpu


def _field_counts(idx_ref, row_start, row_stop, vocab):
    """counts[v, b] = #{f in [row_start, row_stop) : idx_ref[f, b] == v}.

    Accumulates in int32, single cast to f32 at the end (review item 5).
    Out-of-range indices silently contribute nothing (matches zero pad cols).
    """
    tb = idx_ref.shape[1]
    iota_v = jax.lax.broadcasted_iota(jnp.int32, (vocab, tb), 0)
    cnt = jnp.zeros((vocab, tb), jnp.int32)
    for f in range(row_start, row_stop):            # static, tiny (<= 8 fields)
        cnt = cnt + (idx_ref[f:f + 1, :] == iota_v).astype(jnp.int32)
    return cnt.astype(jnp.float32)


def fm_kernel(idx_ref, ui_tab2_ref, ft_tab2_ref, ft_tab_ref, out_ref,
              *, n_ui, n_ft, n_pf, emb):
    """One batch tile of forward_1234 (old_new='old', eval mode).

    idx_ref:     (2+F1+F2, TB)   int32  [ui ids ; feature ids ; preference ids]
    ui_tab2_ref: (2E, Vui_pad)   f32    [ui_emb.T ; (ui_emb**2).T]     (resident)
    ft_tab2_ref: (2E, Vf_pad)    f32    [feature_emb.T ; (feature_emb**2).T]
    ft_tab_ref:  (E,  Vf_pad)    f32    feature_emb.T                  (resident)
    out_ref:     (1, TB)         f32    FM result (global bias added in wrapper)
    """
    v_ui = ui_tab2_ref.shape[1]
    v_ft = ft_tab2_ref.shape[1]

    cnt_ui = _field_counts(idx_ref, 0, n_ui, v_ui)                 # (Vui, TB)
    cnt_ft = _field_counts(idx_ref, n_ui, n_ui + n_ft, v_ft)       # (Vf,  TB)
    cnt_pf = _field_counts(idx_ref, n_ui + n_ft,
                           n_ui + n_ft + n_pf, v_ft)               # (Vf,  TB)

    dot = functools.partial(jnp.dot, preferred_element_type=jnp.float32)
    ui_both = dot(ui_tab2_ref[...], cnt_ui)     # (2E, TB): [sum ; sum of squares]
    pf_both = dot(ft_tab2_ref[...], cnt_pf)     # (2E, TB): [sum ; sum of squares]
    ft_sum = dot(ft_tab_ref[...], cnt_ft)       # (E,  TB): sum_f feature_emb[feat_f]

    pf_sum = pf_both[:emb]                      # sublane-aligned slices (E = mult of 8)
    s_all = ui_both[:emb] + pf_sum              # sum over cat([ui, preference])
    sq_all = ui_both[emb:] + pf_both[emb:]      # sum of squares over the same
    fm = 0.5 * (s_all * s_all - sq_all)         # (E, TB)
    # TODO(synk): nn.Dropout(p=dr) on FM is identity in eval mode; training-mode
    # stochastic dropout is not implemented.

    # matmul(feat, pref^T).sum((1,2)) == <sum_f feat_f, sum_p pref_p>  (exact)
    total = fm + ft_sum * pf_sum                # (E, TB)
    out_ref[...] = jnp.sum(total, axis=0, keepdims=True)   # lane-dense (1, TB) store


def _pick_tile(batch, tb):
    """Auto tile: amortize per-step overhead, keep grid >= 2 for v7x megacore."""
    if tb is not None:
        assert tb % 128 == 0, "batch tile must be lane-aligned"
        return tb
    tb = 128 * ((batch + 2 * 128 - 1) // (2 * 128))   # aim for a 2-step grid
    return int(min(max(tb, 128), 4096))


def fm_forward(ui_emb, feature_emb, bias, ui_pair, feature_index,
               preference_index, *, tb=None):
    """Mirrors FactorizationMachine.forward_1234 with old_new='old' (eval mode)."""
    batch = ui_pair.shape[0]
    emb = ui_emb.shape[1] - 1

    tb = _pick_tile(batch, tb)
    grid = pl.cdiv(batch, tb)
    pad_b = grid * tb

    # ---- index prep: one fused (2+F1+F2, padB) int32 stream -----------------
    idx_all = jnp.concatenate(
        [ui_pair.astype(jnp.int32),
         feature_index.astype(jnp.int32),
         preference_index.astype(jnp.int32)], axis=1).T        # (F_tot, B)
    if pad_b != batch:
        # padded rows index id 0 (a real user id) -> garbage values that are
        # sliced off below with [:batch]; keep that invariant.
        idx_all = jnp.pad(idx_all, ((0, 0), (0, pad_b - batch)))

    n_ui, f1, f2 = ui_pair.shape[1], feature_index.shape[1], preference_index.shape[1]
    f_tot = n_ui + f1 + f2

    # ---- table prep: strip bias column, transpose, pad V, stack squares -----
    def prep_table(tab):
        vals = tab[:, :emb].astype(jnp.float32).T              # (E, V)
        pad_v = (-vals.shape[1]) % 8
        if pad_v:                                              # zero cols -> no contribution
            vals = jnp.pad(vals, ((0, 0), (0, pad_v)))
        stacked = jnp.concatenate([vals, vals * vals], axis=0)  # (2E, V_pad)
        return vals, stacked

    _, ui_tab2 = prep_table(ui_emb)                            # (2E, Vui_pad)
    ft_tab, ft_tab2 = prep_table(feature_emb)                  # (E, Vf_pad), (2E, Vf_pad)
    v_ui, v_ft = ui_tab2.shape[1], ft_tab2.shape[1]

    # ---- scoped-VMEM estimate (only raise the limit when actually needed) ---
    est = (2 * f_tot * tb * 4                 # double-buffered idx tile
           + 3 * max(v_ui, v_ft) * tb * 4     # counts matrices
           + 12 * emb * tb * 4                # live (E/2E, TB) intermediates
           + 2 * tb * 4                       # double-buffered output row
           + 2 * 4 * (2 * emb * (v_ui + v_ft) + emb * v_ft))   # resident tables
    cp = dict(dimension_semantics=("parallel",))
    if est > 12 * 1024 * 1024:
        cp["vmem_limit_bytes"] = int(min(2 * est, 60 * 1024 * 1024))

    kernel = functools.partial(fm_kernel, n_ui=n_ui, n_ft=f1, n_pf=f2, emb=emb)

    out = pl.pallas_call(
        kernel,
        out_shape=jax.ShapeDtypeStruct((1, pad_b), jnp.float32),
        grid=(grid,),
        in_specs=[
            pl.BlockSpec((f_tot, tb), lambda i: (0, i)),        # fused index stream
            pl.BlockSpec(ui_tab2.shape, lambda i: (0, 0)),      # resident tables
            pl.BlockSpec(ft_tab2.shape, lambda i: (0, 0)),
            pl.BlockSpec(ft_tab.shape, lambda i: (0, 0)),
        ],
        out_specs=pl.BlockSpec((1, tb), lambda i: (0, i)),      # contiguous lane-dense row
        compiler_params=pltpu.CompilerParams(**cp),
    )(idx_all, ui_tab2, ft_tab2, ft_tab)

    result = out[0, :batch].reshape(batch, 1) + bias.reshape(1, 1)

    # Secondary outputs (pure gather/concat glue required by the module API;
    # they must be materialized in HBM regardless and dominate HBM traffic).
    fm_ui = ui_emb[ui_pair]                         # (B, 2,  E+1)
    fm_pref = feature_emb[preference_index]         # (B, F2, E+1)
    fm_feat = feature_emb[feature_index]            # (B, F1, E+1)

    feature_bias_matrix = jnp.concatenate(
        [fm_ui[..., -1:], fm_pref[..., -1:]], axis=1)                      # (B, 2+F2, 1)
    nz_cat = jnp.concatenate(
        [fm_ui[..., :-1], fm_pref[..., :-1], fm_feat[..., :-1]], axis=1)   # (B, 2+F2+F1, E)
    return result, feature_bias_matrix, nz_cat


if __name__ == "__main__":
    # Module hyper-parameters (small, synthetic).
    emb_size = 32
    user_length = 10
    item_length = 10
    feature_length = 20
    ip = 0.01

    B, F1, F2 = 256, 8, 8

    key = jax.random.PRNGKey(0)
    k_ui, k_feat, k_bias, k_u, k_i, k_f, k_p = jax.random.split(key, 7)

    # Deterministic parameter init (matches shapes/std of init_weight()).
    ui_emb = 0.01 * jax.random.normal(
        k_ui, (user_length + item_length + 1, emb_size + 1), dtype=jnp.float32)
    feature_emb = ip * jax.random.normal(
        k_feat, (feature_length + 1, emb_size + 1), dtype=jnp.float32)
    feature_emb = feature_emb.at[feature_length, :].set(0.0)       # padding_idx row
    bias = 0.01 * jax.random.normal(k_bias, (1,), dtype=jnp.float32)

    # Deterministic index inputs.
    users = jax.random.randint(k_u, (B, 1), 0, user_length)
    items = user_length + jax.random.randint(k_i, (B, 1), 0, item_length)
    ui_pair = jnp.concatenate([users, items], axis=1).astype(jnp.int32)
    feature_index = jax.random.randint(
        k_f, (B, F1), 0, feature_length + 1).astype(jnp.int32)
    preference_index = jax.random.randint(
        k_p, (B, F2), 0, feature_length + 1).astype(jnp.int32)

    fwd = jax.jit(fm_forward)
    result, feature_bias_matrix, nz_cat = fwd(
        ui_emb, feature_emb, bias, ui_pair, feature_index, preference_index)
    jax.block_until_ready((result, feature_bias_matrix, nz_cat))

    # Pure-JAX reference of forward_1234 (old_new='old', eval-mode dropout).
    nz_ui = ui_emb[ui_pair][..., :-1]
    nz_ft = feature_emb[feature_index][..., :-1]
    nz_pf = feature_emb[preference_index][..., :-1]
    nm = jnp.concatenate([nz_ui, nz_pf], axis=1)
    fm_term = 0.5 * (jnp.sum(nm, axis=1, keepdims=True) ** 2
                     - jnp.sum(nm * nm, axis=1, keepdims=True))
    prod = jnp.einsum('bfe,bpe->bfp', nz_ft, nz_pf)
    ref = fm_term.sum(axis=2) + prod.sum(axis=(1, 2))[:, None] + bias

    assert result.shape == (B, 1)
    assert feature_bias_matrix.shape == (B, 2 + F2, 1)
    assert nz_cat.shape == (B, 2 + F2 + F1, emb_size)
    assert jnp.allclose(result, ref, rtol=5e-3, atol=1e-5), (
        float(jnp.max(jnp.abs(result - ref))))
    print("KERNEL_OK")
</pallas_src>

<mosaic_0001>
module attributes {stable_mosaic.version = 11 : i64} {
  func.func @fm_kernel(%arg0: i32, %arg1: memref<18x128xi32, #tpu.memory_space<vmem>>, %arg2: memref<64x24xf32, #tpu.memory_space<vmem>>, %arg3: memref<64x24xf32, #tpu.memory_space<vmem>>, %arg4: memref<32x24xf32, #tpu.memory_space<vmem>>, %arg5: memref<1x128xf32, #tpu.memory_space<vmem>>) attributes {dimension_semantics = [#tpu.dimension_semantics<parallel>], iteration_bounds = array<i64: 2>, scalar_prefetch = 0 : i64, scratch_operands = 0 : i64, tpu.core_type = #tpu.core_type<tc>, window_params = [{transform_indices = @transform_0, window_bounds = array<i64: 18, 128>}, {pipeline_mode = #tpu.pipeline_mode<synchronous>, transform_indices = @transform_1, window_bounds = array<i64: 64, 24>}, {pipeline_mode = #tpu.pipeline_mode<synchronous>, transform_indices = @transform_2, window_bounds = array<i64: 64, 24>}, {pipeline_mode = #tpu.pipeline_mode<synchronous>, transform_indices = @transform_3, window_bounds = array<i64: 32, 24>}, {transform_indices = @transform_4, window_bounds = array<i64: 1, 128>}]} {
    %0 = tpu.iota {dimensions = array<i32: 0>} : vector<24x128xi32>
    %c0_i32 = arith.constant 0 : i32
    %1 = vector.broadcast %c0_i32 : i32 to vector<24x128xi32>
    %c0 = arith.constant 0 : index
    %c0_0 = arith.constant 0 : index
    %2 = vector.load %arg1[%c0, %c0_0] : memref<18x128xi32, #tpu.memory_space<vmem>>, vector<1x128xi32>
    %3 = vector.broadcast %2 : vector<1x128xi32> to vector<24x128xi32>
    %4 = arith.cmpi eq, %3, %0 : vector<24x128xi32>
    %5 = arith.extui %4 : vector<24x128xi1> to vector<24x128xi32>
    %6 = arith.addi %1, %5 : vector<24x128xi32>
    %c1 = arith.constant 1 : index
    %c0_1 = arith.constant 0 : index
    %7 = vector.load %arg1[%c1, %c0_1] : memref<18x128xi32, #tpu.memory_space<vmem>>, vector<1x128xi32>
    %8 = vector.broadcast %7 : vector<1x128xi32> to vector<24x128xi32>
    %9 = arith.cmpi eq, %8, %0 : vector<24x128xi32>
    %10 = arith.extui %9 : vector<24x128xi1> to vector<24x128xi32>
    %11 = arith.addi %6, %10 : vector<24x128xi32>
    %12 = arith.sitofp %11 : vector<24x128xi32> to vector<24x128xf32>
    %13 = tpu.iota {dimensions = array<i32: 0>} : vector<24x128xi32>
    %c0_i32_2 = arith.constant 0 : i32
    %14 = vector.broadcast %c0_i32_2 : i32 to vector<24x128xi32>
    %c2 = arith.constant 2 : index
    %c0_3 = arith.constant 0 : index
    %15 = vector.load %arg1[%c2, %c0_3] : memref<18x128xi32, #tpu.memory_space<vmem>>, vector<1x128xi32>
    %16 = vector.broadcast %15 : vector<1x128xi32> to vector<24x128xi32>
    %17 = arith.cmpi eq, %16, %13 : vector<24x128xi32>
    %18 = arith.extui %17 : vector<24x128xi1> to vector<24x128xi32>
    %19 = arith.addi %14, %18 : vector<24x128xi32>
    %c3 = arith.constant 3 : index
    %c0_4 = arith.constant 0 : index
    %20 = vector.load %arg1[%c3, %c0_4] : memref<18x128xi32, #tpu.memory_space<vmem>>, vector<1x128xi32>
    %21 = vector.broadcast %20 : vector<1x128xi32> to vector<24x128xi32>
    %22 = arith.cmpi eq, %21, %13 : vector<24x128xi32>
    %23 = arith.extui %22 : vector<24x128xi1> to vector<24x128xi32>
    %24 = arith.addi %19, %23 : vector<24x128xi32>
    %c4 = arith.constant 4 : index
    %c0_5 = arith.constant 0 : index
    %25 = vector.load %arg1[%c4, %c0_5] : memref<18x128xi32, #tpu.memory_space<vmem>>, vector<1x128xi32>
    %26 = vector.broadcast %25 : vector<1x128xi32> to vector<24x128xi32>
    %27 = arith.cmpi eq, %26, %13 : vector<24x128xi32>
    %28 = arith.extui %27 : vector<24x128xi1> to vector<24x128xi32>
    %29 = arith.addi %24, %28 : vector<24x128xi32>
    %c5 = arith.constant 5 : index
    %c0_6 = arith.constant 0 : index
    %30 = vector.load %arg1[%c5, %c0_6] : memref<18x128xi32, #tpu.memory_space<vmem>>, vector<1x128xi32>
    %31 = vector.broadcast %30 : vector<1x128xi32> to vector<24x128xi32>
    %32 = arith.cmpi eq, %31, %13 : vector<24x128xi32>
    %33 = arith.extui %32 : vector<24x128xi1> to vector<24x128xi32>
    %34 = arith.addi %29, %33 : vector<24x128xi32>
    %c6 = arith.constant 6 : index
    %c0_7 = arith.constant 0 : index
    %35 = vector.load %arg1[%c6, %c0_7] : memref<18x128xi32, #tpu.memory_space<vmem>>, vector<1x128xi32>
    %36 = vector.broadcast %35 : vector<1x128xi32> to vector<24x128xi32>
    %37 = arith.cmpi eq, %36, %13 : vector<24x128xi32>
    %38 = arith.extui %37 : vector<24x128xi1> to vector<24x128xi32>
    %39 = arith.addi %34, %38 : vector<24x128xi32>
    %c7 = arith.constant 7 : index
    %c0_8 = arith.constant 0 : index
    %40 = vector.load %arg1[%c7, %c0_8] : memref<18x128xi32, #tpu.memory_space<vmem>>, vector<1x128xi32>
    %41 = vector.broadcast %40 : vector<1x128xi32> to vector<24x128xi32>
    %42 = arith.cmpi eq, %41, %13 : vector<24x128xi32>
    %43 = arith.extui %42 : vector<24x128xi1> to vector<24x128xi32>
    %44 = arith.addi %39, %43 : vector<24x128xi32>
    %c8 = arith.constant 8 : index
    %c0_9 = arith.constant 0 : index
    %45 = vector.load %arg1[%c8, %c0_9] : memref<18x128xi32, #tpu.memory_space<vmem>>, vector<1x128xi32>
    %46 = vector.broadcast %45 : vector<1x128xi32> to vector<24x128xi32>
    %47 = arith.cmpi eq, %46, %13 : vector<24x128xi32>
    %48 = arith.extui %47 : vector<24x128xi1> to vector<24x128xi32>
    %49 = arith.addi %44, %48 : vector<24x128xi32>
    %c9 = arith.constant 9 : index
    %c0_10 = arith.constant 0 : index
    %50 = vector.load %arg1[%c9, %c0_10] : memref<18x128xi32, #tpu.memory_space<vmem>>, vector<1x128xi32>
    %51 = vector.broadcast %50 : vector<1x128xi32> to vector<24x128xi32>
    %52 = arith.cmpi eq, %51, %13 : vector<24x128xi32>
    %53 = arith.extui %52 : vector<24x128xi1> to vector<24x128xi32>
    %54 = arith.addi %49, %53 : vector<24x128xi32>
    %55 = arith.sitofp %54 : vector<24x128xi32> to vector<24x128xf32>
    %56 = tpu.iota {dimensions = array<i32: 0>} : vector<24x128xi32>
    %c0_i32_11 = arith.constant 0 : i32
    %57 = vector.broadcast %c0_i32_11 : i32 to vector<24x128xi32>
    %c10 = arith.constant 10 : index
    %c0_12 = arith.constant 0 : index
    %58 = vector.load %arg1[%c10, %c0_12] : memref<18x128xi32, #tpu.memory_space<vmem>>, vector<1x128xi32>
    %59 = vector.broadcast %58 : vector<1x128xi32> to vector<24x128xi32>
    %60 = arith.cmpi eq, %59, %56 : vector<24x128xi32>
    %61 = arith.extui %60 : vector<24x128xi1> to vector<24x128xi32>
    %62 = arith.addi %57, %61 : vector<24x128xi32>
    %c11 = arith.constant 11 : index
    %c0_13 = arith.constant 0 : index
    %63 = vector.load %arg1[%c11, %c0_13] : memref<18x128xi32, #tpu.memory_space<vmem>>, vector<1x128xi32>
    %64 = vector.broadcast %63 : vector<1x128xi32> to vector<24x128xi32>
    %65 = arith.cmpi eq, %64, %56 : vector<24x128xi32>
    %66 = arith.extui %65 : vector<24x128xi1> to vector<24x128xi32>
    %67 = arith.addi %62, %66 : vector<24x128xi32>
    %c12 = arith.constant 12 : index
    %c0_14 = arith.constant 0 : index
    %68 = vector.load %arg1[%c12, %c0_14] : memref<18x128xi32, #tpu.memory_space<vmem>>, vector<1x128xi32>
    %69 = vector.broadcast %68 : vector<1x128xi32> to vector<24x128xi32>
    %70 = arith.cmpi eq, %69, %56 : vector<24x128xi32>
    %71 = arith.extui %70 : vector<24x128xi1> to vector<24x128xi32>
    %72 = arith.addi %67, %71 : vector<24x128xi32>
    %c13 = arith.constant 13 : index
    %c0_15 = arith.constant 0 : index
    %73 = vector.load %arg1[%c13, %c0_15] : memref<18x128xi32, #tpu.memory_space<vmem>>, vector<1x128xi32>
    %74 = vector.broadcast %73 : vector<1x128xi32> to vector<24x128xi32>
    %75 = arith.cmpi eq, %74, %56 : vector<24x128xi32>
    %76 = arith.extui %75 : vector<24x128xi1> to vector<24x128xi32>
    %77 = arith.addi %72, %76 : vector<24x128xi32>
    %c14 = arith.constant 14 : index
    %c0_16 = arith.constant 0 : index
    %78 = vector.load %arg1[%c14, %c0_16] : memref<18x128xi32, #tpu.memory_space<vmem>>, vector<1x128xi32>
    %79 = vector.broadcast %78 : vector<1x128xi32> to vector<24x128xi32>
    %80 = arith.cmpi eq, %79, %56 : vector<24x128xi32>
    %81 = arith.extui %80 : vector<24x128xi1> to vector<24x128xi32>
    %82 = arith.addi %77, %81 : vector<24x128xi32>
    %c15 = arith.constant 15 : index
    %c0_17 = arith.constant 0 : index
    %83 = vector.load %arg1[%c15, %c0_17] : memref<18x128xi32, #tpu.memory_space<vmem>>, vector<1x128xi32>
    %84 = vector.broadcast %83 : vector<1x128xi32> to vector<24x128xi32>
    %85 = arith.cmpi eq, %84, %56 : vector<24x128xi32>
    %86 = arith.extui %85 : vector<24x128xi1> to vector<24x128xi32>
    %87 = arith.addi %82, %86 : vector<24x128xi32>
    %c16 = arith.constant 16 : index
    %c0_18 = arith.constant 0 : index
    %88 = vector.load %arg1[%c16, %c0_18] : memref<18x128xi32, #tpu.memory_space<vmem>>, vector<1x128xi32>
    %89 = vector.broadcast %88 : vector<1x128xi32> to vector<24x128xi32>
    %90 = arith.cmpi eq, %89, %56 : vector<24x128xi32>
    %91 = arith.extui %90 : vector<24x128xi1> to vector<24x128xi32>
    %92 = arith.addi %87, %91 : vector<24x128xi32>
    %c17 = arith.constant 17 : index
    %c0_19 = arith.constant 0 : index
    %93 = vector.load %arg1[%c17, %c0_19] : memref<18x128xi32, #tpu.memory_space<vmem>>, vector<1x128xi32>
    %94 = vector.broadcast %93 : vector<1x128xi32> to vector<24x128xi32>
    %95 = arith.cmpi eq, %94, %56 : vector<24x128xi32>
    %96 = arith.extui %95 : vector<24x128xi1> to vector<24x128xi32>
    %97 = arith.addi %92, %96 : vector<24x128xi32>
    %98 = arith.sitofp %97 : vector<24x128xi32> to vector<24x128xf32>
    %c0_20 = arith.constant 0 : index
    %c0_21 = arith.constant 0 : index
    %99 = vector.load %arg2[%c0_20, %c0_21] : memref<64x24xf32, #tpu.memory_space<vmem>>, vector<64x24xf32>
    %cst = arith.constant dense<0.000000e+00> : vector<64x128xf32>
    %100 = tpu.matmul %99, %12, %cst {dimension_numbers = #tpu.dot_dimension_numbers<[1], [0], [0], [1], [0, 0, 1, 1], [], []>} : vector<64x24xf32>, vector<24x128xf32>, vector<64x128xf32> -> vector<64x128xf32>
    %c0_22 = arith.constant 0 : index
    %c0_23 = arith.constant 0 : index
    %101 = vector.load %arg3[%c0_22, %c0_23] : memref<64x24xf32, #tpu.memory_space<vmem>>, vector<64x24xf32>
    %cst_24 = arith.constant dense<0.000000e+00> : vector<64x128xf32>
    %102 = tpu.matmul %101, %98, %cst_24 {dimension_numbers = #tpu.dot_dimension_numbers<[1], [0], [0], [1], [0, 0, 1, 1], [], []>} : vector<64x24xf32>, vector<24x128xf32>, vector<64x128xf32> -> vector<64x128xf32>
    %c0_25 = arith.constant 0 : index
    %c0_26 = arith.constant 0 : index
    %103 = vector.load %arg4[%c0_25, %c0_26] : memref<32x24xf32, #tpu.memory_space<vmem>>, vector<32x24xf32>
    %cst_27 = arith.constant dense<0.000000e+00> : vector<32x128xf32>
    %104 = tpu.matmul %103, %55, %cst_27 {dimension_numbers = #tpu.dot_dimension_numbers<[1], [0], [0], [1], [0, 0, 1, 1], [], []>} : vector<32x24xf32>, vector<24x128xf32>, vector<32x128xf32> -> vector<32x128xf32>
    %105 = vector.extract_strided_slice %102 {offsets = [0, 0], sizes = [32, 128], strides = [1, 1]} : vector<64x128xf32> to vector<32x128xf32>
    %106 = vector.extract_strided_slice %100 {offsets = [0, 0], sizes = [32, 128], strides = [1, 1]} : vector<64x128xf32> to vector<32x128xf32>
    %107 = arith.addf %106, %105 : vector<32x128xf32>
    %108 = vector.extract_strided_slice %100 {offsets = [32, 0], sizes = [32, 128], strides = [1, 1]} : vector<64x128xf32> to vector<32x128xf32>
    %109 = vector.extract_strided_slice %102 {offsets = [32, 0], sizes = [32, 128], strides = [1, 1]} : vector<64x128xf32> to vector<32x128xf32>
    %110 = arith.addf %108, %109 : vector<32x128xf32>
    %111 = arith.mulf %107, %107 : vector<32x128xf32>
    %112 = arith.subf %111, %110 : vector<32x128xf32>
    %cst_28 = arith.constant 5.000000e-01 : f32
    %113 = vector.broadcast %cst_28 : f32 to vector<32x128xf32>
    %114 = arith.mulf %113, %112 : vector<32x128xf32>
    %115 = arith.mulf %104, %105 : vector<32x128xf32>
    %116 = arith.addf %114, %115 : vector<32x128xf32>
    %cst_29 = arith.constant dense<0.000000e+00> : vector<128xf32>
    %117 = vector.multi_reduction <add>, %116, %cst_29 [0] : vector<32x128xf32> to vector<128xf32>
    %118 = vector.shape_cast %117 : vector<128xf32> to vector<1x128xf32>
    %c0_30 = arith.constant 0 : index
    %c0_31 = arith.constant 0 : index
    %119 = vector.load %arg5[%c0_30, %c0_31] : memref<1x128xf32, #tpu.memory_space<vmem>>, vector<1x128xf32>
    tpu.vector_store %arg5[%c0_30, %c0_31], %118 {strides = array<i32>} : memref<1x128xf32, #tpu.memory_space<vmem>>, vector<1x128xf32>,
    return
  }
  func.func @transform_0(%arg0: i32) -> (i32, i32) {
    %c0_i32 = arith.constant 0 : i32
    %c0_i32_0 = arith.constant 0 : i32
    return %c0_i32, %arg0 : i32, i32
  }
  func.func @transform_1(%arg0: i32) -> (i32, i32) {
    %c0_i32 = arith.constant 0 : i32
    %c0_i32_0 = arith.constant 0 : i32
    %c0_i32_1 = arith.constant 0 : i32
    return %c0_i32, %c0_i32_0 : i32, i32
  }
  func.func @transform_2(%arg0: i32) -> (i32, i32) {
    %c0_i32 = arith.constant 0 : i32
    %c0_i32_0 = arith.constant 0 : i32
    %c0_i32_1 = arith.constant 0 : i32
    return %c0_i32, %c0_i32_0 : i32, i32
  }
  func.func @transform_3(%arg0: i32) -> (i32, i32) {
    %c0_i32 = arith.constant 0 : i32
    %c0_i32_0 = arith.constant 0 : i32
    %c0_i32_1 = arith.constant 0 : i32
    return %c0_i32, %c0_i32_0 : i32, i32
  }
  func.func @transform_4(%arg0: i32) -> (i32, i32) {
    %c0_i32 = arith.constant 0 : i32
    %c0_i32_0 = arith.constant 0 : i32
    return %c0_i32, %arg0 : i32, i32
  }
}

</mosaic_0001>

<llo_original>
// kernel: fm_forward.1
$region0: #{fm_forward.1}
  #allocation0 [shape = 'u32[]', space=smem, size = 0x4, offset = 0x4, fixed_abs, tag = 'smem constant byte address 0x4 - core index']
  #allocation1 [shape = 'u32[144,128]{1,0:T(1,128)}', space=vmem, size = 0x12000, scoped, tag = 'internal scratch']
  %s0 = inlined_call_operand.vmem [shape: s32[18,256], index: 0, kind: input, shape index: {}]
  %s1 = inlined_call_operand.vmem [shape: f32[64,24], index: 1, kind: input, shape index: {}]
  %s2 = inlined_call_operand.vmem [shape: f32[64,24], index: 2, kind: input, shape index: {}]
  %s3 = inlined_call_operand.vmem [shape: f32[32,24], index: 3, kind: input, shape index: {}]
  %s4 = inlined_call_operand.vmem [shape: f32[1,256], index: 4, kind: output, shape index: {}]
  %s5 = sld [smem:[#allocation0]]
  $region87: #{fm_forward.1} parent=0
    _
  %s7 = ssub.s32 1, %s5
  %s8 = scalar_select 0, %s7, %s5
  $region1: #{fm_forward.1} parent=0
    #allocation2 [shape = 'u8[24576]{0}', space=vmem, size = 0x6000, scoped, tag = 'input window, operand 0']
    loop: start=0, step=1, limit=4
    $region2: #{fm_forward.1} parent=1 // loop_pre_header
      _
    $region3: #{fm_forward.1} parent=1 // loop_header
      %s10 = sphi 0, %s14
      %p11 = scmp.ge.s32.totalorder %s10, 4
      %s20 = sphi 0, %s22
      %s23 = sphi 0, %s20
      %s24 = sphi 0, %s23
      %s40 = sphi 0, %s24
      %s44 = sphi 0, %s44
      %s46 = sphi 0, %s44
      %s47 = sphi 0, %s46
      %s61 = sphi 0, %s47
      %s65 = sphi 0, %s65
      %s67 = sphi 0, %s65
      %s68 = sphi 0, %s67
      %s82 = sphi 0, %s68
      %s86 = sphi 0, %s86
      %s88 = sphi 0, %s86
      %s89 = sphi 0, %s88
      %s103 = sphi 0, %s89
      %s109 = sphi 0, %s111
      %s112 = sphi 0, %s109
      %s113 = sphi 0, %s112
      %s129 = sphi 0, %s113
    $region4: #{fm_forward.1} parent=1 // loop_header_branch
      %13 = sbr.rel (%p11) target = $region8
    $region5: #{fm_forward.1} parent=1 // loop_body
      %s15 = ssub.s32 %s10, 1
      %s16 = ssub.s32 %s10, 2
      %s17 = sadd.s32 %s10, 1
      %s18 = ssub.s32 %s10, %s17
      %p19 = scmp.eq.s32.totalorder %s18, 0
      %s21 = sadd.s32 %s20, 1
      %s22 = scalar_select %p19, %s20, %s21
      %p25 = pneg %p19
      %p26 = scmp.eq.s32.totalorder %s10, 1
      %p27 = por %p25, %p26
      %p28 = scmp.ne.s32.totalorder %s20, %s23
      %p29 = scmp.eq.s32.totalorder %s10, 0
      %p30 = por %p28, %p29
      %p31 = scmp.ne.s32.totalorder %s20, %s23
      %p32 = scmp.eq.s32.totalorder %s15, 1
      %p33 = por %p31, %p32
      %p34 = scmp.ne.s32.totalorder %s23, %s24
      %p35 = scmp.eq.s32.totalorder %s15, 0
      %p36 = por %p34, %p35
      %p37 = scmp.ne.s32.totalorder %s23, %s24
      %p38 = scmp.eq.s32.totalorder %s16, 1
      %p39 = por %p37, %p38
      %p41 = scmp.ne.s32.totalorder %s24, %s40
      %p42 = scmp.eq.s32.totalorder %s16, 0
      %p43 = por %p41, %p42
      %s45 = sadd.s32 %s44, 1
      %p48 = scmp.eq.s32.totalorder %s10, 1
      %p49 = scmp.ne.s32.totalorder %s44, %s46
      %p50 = scmp.eq.s32.totalorder %s10, 0
      %p51 = por %p49, %p50
      %p52 = scmp.ne.s32.totalorder %s44, %s46
      %p53 = scmp.eq.s32.totalorder %s15, 1
      %p54 = por %p52, %p53
      %p55 = scmp.ne.s32.totalorder %s46, %s47
      %p56 = scmp.eq.s32.totalorder %s15, 0
      %p57 = por %p55, %p56
      %p58 = scmp.ne.s32.totalorder %s46, %s47
      %p59 = scmp.eq.s32.totalorder %s16, 1
      %p60 = por %p58, %p59
      %p62 = scmp.ne.s32.totalorder %s47, %s61
      %p63 = scmp.eq.s32.totalorder %s16, 0
      %p64 = por %p62, %p63
      %s66 = sadd.s32 %s65, 1
      %p69 = scmp.eq.s32.totalorder %s10, 1
      %p70 = scmp.ne.s32.totalorder %s65, %s67
      %p71 = scmp.eq.s32.totalorder %s10, 0
      %p72 = por %p70, %p71
      %p73 = scmp.ne.s32.totalorder %s65, %s67
      %p74 = scmp.eq.s32.totalorder %s15, 1
      %p75 = por %p73, %p74
      %p76 = scmp.ne.s32.totalorder %s67, %s68
      %p77 = scmp.eq.s32.totalorder %s15, 0
      %p78 = por %p76, %p77
      %p79 = scmp.ne.s32.totalorder %s67, %s68
      %p80 = scmp.eq.s32.totalorder %s16, 1
      %p81 = por %p79, %p80
      %p83 = scmp.ne.s32.totalorder %s68, %s82
      %p84 = scmp.eq.s32.totalorder %s16, 0
      %p85 = por %p83, %p84
      %s87 = sadd.s32 %s86, 1
      %p90 = scmp.eq.s32.totalorder %s10, 1
      %p91 = scmp.ne.s32.totalorder %s86, %s88
      %p92 = scmp.eq.s32.totalorder %s10, 0
      %p93 = por %p91, %p92
      %p94 = scmp.ne.s32.totalorder %s86, %s88
      %p95 = scmp.eq.s32.totalorder %s15, 1
      %p96 = por %p94, %p95
      %p97 = scmp.ne.s32.totalorder %s88, %s89
      %p98 = scmp.eq.s32.totalorder %s15, 0
      %p99 = por %p97, %p98
      %p100 = scmp.ne.s32.totalorder %s88, %s89
      %p101 = scmp.eq.s32.totalorder %s16, 1
      %p102 = por %p100, %p101
      %p104 = scmp.ne.s32.totalorder %s89, %s103
      %p105 = scmp.eq.s32.totalorder %s16, 0
      %p106 = por %p104, %p105
      %s107 = ssub.s32 %s10, %s17
      %p108 = scmp.eq.s32.totalorder %s107, 0
      %s110 = sadd.s32 %s109, 1
      %s111 = scalar_select %p108, %s109, %s110
      %p114 = pneg %p108
      %p115 = scmp.eq.s32.totalorder %s10, 1
      %p116 = por %p114, %p115
      %p117 = scmp.ne.s32.totalorder %s109, %s112
      %p118 = scmp.eq.s32.totalorder %s10, 0
      %p119 = por %p117, %p118
      %p120 = scmp.ne.s32.totalorder %s109, %s112
      %p121 = scmp.eq.s32.totalorder %s15, 1
      %p122 = por %p120, %p121
      %p123 = scmp.ne.s32.totalorder %s112, %s113
      %p124 = scmp.eq.s32.totalorder %s15, 0
      %p125 = por %p123, %p124
      %p126 = scmp.ne.s32.totalorder %s112, %s113
      %p127 = scmp.eq.s32.totalorder %s16, 1
      %p128 = por %p126, %p127
      %p130 = scmp.ne.s32.totalorder %s113, %s129
      %p131 = scmp.eq.s32.totalorder %s16, 0
      %p132 = por %p130, %p131
      %p133 = scmp.le.s32.totalorder 1, %s10
      %p134 = scmp.lt.s32.totalorder %s10, 3
      %p135 = pnand %p133, %p134
      %p136 = pneg %p135
      // Predicated region
      $region9: #{fm_forward.1} parent=5 // pred_check
        _
      $region10: #{fm_forward.1} parent=5 // pred_check_branch
        %138 = sbr.rel (%p135) target = $region12
      $region11: #{fm_forward.1} parent=5 // pred_region
        %s139 = ssub.s32 %s10, 1
        // Predicated region
        $region13: #{fm_forward.1} parent=11 // pred_check
          %p140 = pneg %p57
        $region14: #{fm_forward.1} parent=11 // pred_check_branch
          %142 = sbr.rel (%p140) target = $region16
        $region15: #{fm_forward.1} parent=11 // pred_region
          _
        $region16: #{fm_forward.1} parent=11 // pred_fallthru
          _
        // Predicated region
        $region17: #{fm_forward.1} parent=11 // pred_check
          %p143 = pneg %p78
        $region18: #{fm_forward.1} parent=11 // pred_check_branch
          %145 = sbr.rel (%p143) target = $region20
        $region19: #{fm_forward.1} parent=11 // pred_region
          _
        $region20: #{fm_forward.1} parent=11 // pred_fallthru
          _
        // Predicated region
        $region21: #{fm_forward.1} parent=11 // pred_check
          %p146 = pneg %p99
        $region22: #{fm_forward.1} parent=11 // pred_check_branch
          %148 = sbr.rel (%p146) target = $region24
        $region23: #{fm_forward.1} parent=11 // pred_region
          _
        $region24: #{fm_forward.1} parent=11 // pred_fallthru
          _
      $region12: #{fm_forward.1} parent=5 // pred_fallthru
        _
      %p149 = scmp.lt.s32.totalorder %s10, 2
      // Predicated region
      $region25: #{fm_forward.1} parent=5 // pred_check
        %p150 = pneg %p149
      $region26: #{fm_forward.1} parent=5 // pred_check_branch
        %152 = sbr.rel (%p150) target = $region28
      $region27: #{fm_forward.1} parent=5 // pred_region
        // Predicated region
        $region29: #{fm_forward.1} parent=27 // pred_check
          %p153 = pneg %p30
        $region30: #{fm_forward.1} parent=27 // pred_check_branch
          %155 = sbr.rel (%p153) target = $region32
        $region31: #{fm_forward.1} parent=27 // pred_region
          %s156 = sand.u32 %s20, 1
          %s157 = sand.u32 %s20, 1
          %s158 = smul.addr %s157, 24
          %s159 = scalar_lea.vmem [#allocation2], %s158
          %s160 = smul.addr %s10, 8
          %s161 = scalar_lea.vmem %s0, %s160
          // Predicated region
          $region33: #{fm_forward.1} parent=31 // pred_check
            _
          $region34: #{fm_forward.1} parent=31 // pred_check_branch
            %163 = sbr.rel (0) target = $region36
          $region35: #{fm_forward.1} parent=31 // pred_region
            // Predicated region
            $region37: #{fm_forward.1} parent=35 // pred_check
              _
            $region38: #{fm_forward.1} parent=35 // pred_check_branch
              %165 = sbr.rel (0) target = $region40
            $region39: #{fm_forward.1} parent=35 // pred_region
              // Predicated region
              $region52: #{fm_forward.1} parent=39 // pred_check
                _
              $region53: #{fm_forward.1} parent=39 // pred_check_branch
                %184 = sbr.rel (0) target = $region55
              $region54: #{fm_forward.1} parent=39 // pred_region
                loop: start=0, step=1, limit=1
                $region56: #{fm_forward.1} parent=54 // loop_pre_header
                  _
                $region57: #{fm_forward.1} parent=54 // loop_header
                  %s186 = sphi 0, %s190
                  %p187 = scmp.ge.s32.totalorder %s186, 1
                  %s191 = sphi %s161, %s161
                  %s192 = sphi %s159, %s159
                $region58: #{fm_forward.1} parent=54 // loop_header_branch
                  %189 = sbr.rel (%p187) target = $region62
                $region59: #{fm_forward.1} parent=54 // loop_body
                  %v193 = vld [vmem:[%s191] sm:$0xff]
                  %194 = vst [vmem:[%s192] sm:$0xff] %v193
                  %v195 = vld [vmem:[%s191 + $0x10] sm:$0xff]
                  %196 = vst [vmem:[%s192 + $0x8] sm:$0xff] %v195
                  %v197 = vld [vmem:[%s191 + $0x20] sm:$0xff]
                  %198 = vst [vmem:[%s192 + $0x10] sm:$0xff] %v197
                $region60: #{fm_forward.1} parent=54 // loop_footer
                  %s190 = sadd.s32 1, %s186
                $region61: #{fm_forward.1} parent=54 // loop_footer_branch
                  %185 = sbr.rel target = $region57
                $region62: #{fm_forward.1} parent=54 // loop_exit
                  _
              $region55: #{fm_forward.1} parent=39 // pred_fallthru
                _
              // Predicated region
              $region63: #{fm_forward.1} parent=39 // pred_check
                _
              $region64: #{fm_forward.1} parent=39 // pred_check_branch
                %200 = sbr.rel target = $region66
              $region65: #{fm_forward.1} parent=39 // pred_region
                _
              $region66: #{fm_forward.1} parent=39 // pred_fallthru
                _
            $region40: #{fm_forward.1} parent=35 // pred_fallthru
              _
            // Predicated region
            $region41: #{fm_forward.1} parent=35 // pred_check
              _
            $region42: #{fm_forward.1} parent=35 // pred_check_branch
              %167 = sbr.rel target = $region44
            $region43: #{fm_forward.1} parent=35 // pred_region
              loop: start=0, step=1, limit=1
              $region45: #{fm_forward.1} parent=43 // loop_pre_header
                _
              $region46: #{fm_forward.1} parent=43 // loop_header
                %s170 = sphi 0, %s174
                %p171 = scmp.ge.s32.totalorder %s170, 1
                %s175 = sphi %s161, %s161
                %s176 = sphi %s159, %s159
              $region47: #{fm_forward.1} parent=43 // loop_header_branch
                %173 = sbr.rel (%p171) target = $region51
              $region48: #{fm_forward.1} parent=43 // loop_body
                %v177 = vld [vmem:[%s175] sm:$0xff]
                %178 = vst [vmem:[%s176] sm:$0xff] %v177
                %v179 = vld [vmem:[%s175 + $0x10] sm:$0xff]
                %180 = vst [vmem:[%s176 + $0x8] sm:$0xff] %v179
                %v181 = vld [vmem:[%s175 + $0x20] sm:$0xff]
                %182 = vst [vmem:[%s176 + $0x10] sm:$0xff] %v181
              $region49: #{fm_forward.1} parent=43 // loop_footer
                %s174 = sadd.s32 1, %s170
              $region50: #{fm_forward.1} parent=43 // loop_footer_branch
                %169 = sbr.rel target = $region46
              $region51: #{fm_forward.1} parent=43 // loop_exit
                _
            $region44: #{fm_forward.1} parent=35 // pred_fallthru
              _
          $region36: #{fm_forward.1} parent=31 // pred_fallthru
            _
          %201 = vnop
        $region32: #{fm_forward.1} parent=27 // pred_fallthru
          _
      $region28: #{fm_forward.1} parent=5 // pred_fallthru
        _
      %p202 = scmp.le.s32.totalorder 1, %s10
      %p203 = scmp.lt.s32.totalorder %s10, 3
      %p204 = pnand %p202, %p203
      %p205 = pneg %p204
      // Predicated region
      $region67: #{fm_forward.1} parent=5 // pred_check
        _
      $region68: #{fm_forward.1} parent=5 // pred_check_branch
        %207 = sbr.rel (%p204) target = $region70
      $region69: #{fm_forward.1} parent=5 // pred_region
        %s208 = ssub.s32 %s10, 1
        %s209 = sand.u32 %s23, 1
        %s210 = sand.u32 %s23, 1
        %s211 = smul.addr %s210, 24
        %s212 = scalar_lea.vmem [#allocation2], %s211
        // Predicated region
        $region71: #{fm_forward.1} parent=69 // pred_check
          %p213 = pneg %p36
        $region72: #{fm_forward.1} parent=69 // pred_check_branch
          %215 = sbr.rel (%p213) target = $region74
        $region73: #{fm_forward.1} parent=69 // pred_region
          _
        $region74: #{fm_forward.1} parent=69 // pred_fallthru
          _
        %s216 = sand.u32 %s23, 1
        %s217 = sand.u32 %s23, 1
        %s218 = smul.addr %s217, 24
        %s219 = scalar_lea.vmem [#allocation2], %s218
        %p220 = pneg %p36
        %p221 = pneg %p33
        %p222 = pneg %p57
        %p223 = pneg %p54
        %p224 = pneg %p78
        %p225 = pneg %p75
        %p226 = pneg %p99
        %p227 = pneg %p96
        %p228 = pneg %p125
        %p229 = pneg %p122
        %p230 = scmp.lt.s32.totalorder %s15, 1
        %s231 = scalar_select %p230, %s15, 1
        %s232 = scalar_lea.vmem %s4, %s231
        %p233 = scmp.lt.s32.totalorder %s15, 1
        %s234 = scalar_select %p233, %s15, 1
        %s235 = scalar_lea.vmem %s4, %s234
        %v236 = vlaneseq
        %v237 = vshrl.u32 %v236, 7
        %v238 = vadd.s32 %v237, 8
        %v239 = vadd.s32 %v237, 16
        %v240 = vld [vmem:[%s212] sm:$0x1]
        %v241 = vlaneseq
        %v242 = vshrl.u32 %v241, 7
        %v243 = vsub.s32 0, %v242
        %v244 = vrot.slane %v240, %v243
        %vm245 = vcmp.eq.s32.totalorder %v244, %v237
        %vm246 = vcmp.eq.s32.totalorder %v244, %v238
        %vm247 = vcmp.eq.s32.totalorder %v244, %v239
        %v248 = vsel %vm245, 1, 0
        %v249 = vsel %vm246, 1, 0
        %v250 = vsel %vm247, 1, 0
        %v251 = vld [vmem:[%s212 + $0x1] sm:$0x1]
        %v252 = vlaneseq
        %v253 = vshrl.u32 %v252, 7
        %v254 = vsub.s32 0, %v253
        %v255 = vrot.slane %v251, %v254
        %vm256 = vcmp.eq.s32.totalorder %v255, %v237
        %vm257 = vcmp.eq.s32.totalorder %v255, %v238
        %vm258 = vcmp.eq.s32.totalorder %v255, %v239
        %v259 = vsel %vm256, 1, 0
        %v260 = vsel %vm257, 1, 0
        %v261 = vsel %vm258, 1, 0
        %v262 = vadd.s32 %v248, %v259
        %v263 = vadd.s32 %v249, %v260
        %v264 = vadd.s32 %v250, %v261
        %v265 = vcvt.s32.f32 %v262
        %v266 = vcvt.s32.f32 %v263
        %v267 = vcvt.s32.f32 %v264
        %v268 = vld [vmem:[%s212 + $0x2] sm:$0x1]
        %v269 = vlaneseq
        %v270 = vshrl.u32 %v269, 7
        %v271 = vsub.s32 0, %v270
        %v272 = vrot.slane %v268, %v271
        %vm273 = vcmp.eq.s32.totalorder %v272, %v237
        %vm274 = vcmp.eq.s32.totalorder %v272, %v238
        %vm275 = vcmp.eq.s32.totalorder %v272, %v239
        %v276 = vsel %vm273, 1, 0
        %v277 = vsel %vm274, 1, 0
        %v278 = vsel %vm275, 1, 0
        %v279 = vld [vmem:[%s212 + $0x3] sm:$0x1]
        %v280 = vlaneseq
        %v281 = vshrl.u32 %v280, 7
        %v282 = vsub.s32 0, %v281
        %v283 = vrot.slane %v279, %v282
        %vm284 = vcmp.eq.s32.totalorder %v283, %v237
        %vm285 = vcmp.eq.s32.totalorder %v283, %v238
        %vm286 = vcmp.eq.s32.totalorder %v283, %v239
        %v287 = vsel %vm284, 1, 0
        %v288 = vsel %vm285, 1, 0
        %v289 = vsel %vm286, 1, 0
        %v290 = vadd.s32 %v276, %v287
        %v291 = vadd.s32 %v277, %v288
        %v292 = vadd.s32 %v278, %v289
        %v293 = vld [vmem:[%s212 + $0x4] sm:$0x1]
        %v294 = vlaneseq
        %v295 = vshrl.u32 %v294, 7
        %v296 = vsub.s32 0, %v295
        %v297 = vrot.slane %v293, %v296
        %vm298 = vcmp.eq.s32.totalorder %v297, %v237
        %vm299 = vcmp.eq.s32.totalorder %v297, %v238
        %vm300 = vcmp.eq.s32.totalorder %v297, %v239
        %v301 = vsel %vm298, 1, 0
        %v302 = vsel %vm299, 1, 0
        %v303 = vsel %vm300, 1, 0
        %v304 = vadd.s32 %v290, %v301
        %v305 = vadd.s32 %v291, %v302
        %v306 = vadd.s32 %v292, %v303
        %v307 = vld [vmem:[%s212 + $0x5] sm:$0x1]
        %v308 = vlaneseq
        %v309 = vshrl.u32 %v308, 7
        %v310 = vsub.s32 0, %v309
        %v311 = vrot.slane %v307, %v310
        %vm312 = vcmp.eq.s32.totalorder %v311, %v237
        %vm313 = vcmp.eq.s32.totalorder %v311, %v238
        %vm314 = vcmp.eq.s32.totalorder %v311, %v239
        %v315 = vsel %vm312, 1, 0
        %v316 = vsel %vm313, 1, 0
        %v317 = vsel %vm314, 1, 0
        %v318 = vadd.s32 %v304, %v315
        %v319 = vadd.s32 %v305, %v316
        %v320 = vadd.s32 %v306, %v317
        %v321 = vld [vmem:[%s212 + $0x6] sm:$0x1]
        %v322 = vlaneseq
        %v323 = vshrl.u32 %v322, 7
        %v324 = vsub.s32 0, %v323
        %v325 = vrot.slane %v321, %v324
        %vm326 = vcmp.eq.s32.totalorder %v325, %v237
        %vm327 = vcmp.eq.s32.totalorder %v325, %v238
        %vm328 = vcmp.eq.s32.totalorder %v325, %v239
        %v329 = vsel %vm326, 1, 0
        %v330 = vsel %vm327, 1, 0
        %v331 = vsel %vm328, 1, 0
        %v332 = vadd.s32 %v318, %v329
        %v333 = vadd.s32 %v319, %v330
        %v334 = vadd.s32 %v320, %v331
        %v335 = vld [vmem:[%s212 + $0x7] sm:$0x1]
        %v336 = vlaneseq
        %v337 = vshrl.u32 %v336, 7
        %v338 = vsub.s32 0, %v337
        %v339 = vrot.slane %v335, %v338
        %vm340 = vcmp.eq.s32.totalorder %v339, %v237
        %vm341 = vcmp.eq.s32.totalorder %v339, %v238
        %vm342 = vcmp.eq.s32.totalorder %v339, %v239
        %v343 = vsel %vm340, 1, 0
        %v344 = vsel %vm341, 1, 0
        %v345 = vsel %vm342, 1, 0
        %v346 = vadd.s32 %v332, %v343
        %v347 = vadd.s32 %v333, %v344
        %v348 = vadd.s32 %v334, %v345
        %v349 = vld [vmem:[%s212 + $0x8] sm:$0x1]
        %v350 = vlaneseq
        %v351 = vshrl.u32 %v350, 7
        %v352 = vsub.s32 0, %v351
        %v353 = vrot.slane %v349, %v352
        %vm354 = vcmp.eq.s32.totalorder %v353, %v237
        %vm355 = vcmp.eq.s32.totalorder %v353, %v238
        %vm356 = vcmp.eq.s32.totalorder %v353, %v239
        %v357 = vsel %vm354, 1, 0
        %v358 = vsel %vm355, 1, 0
        %v359 = vsel %vm356, 1, 0
        %v360 = vadd.s32 %v346, %v357
        %v361 = vadd.s32 %v347, %v358
        %v362 = vadd.s32 %v348, %v359
        %v363 = vld [vmem:[%s212 + $0x9] sm:$0x1]
        %v364 = vlaneseq
        %v365 = vshrl.u32 %v364, 7
        %v366 = vsub.s32 0, %v365
        %v367 = vrot.slane %v363, %v366
        %vm368 = vcmp.eq.s32.totalorder %v367, %v237
        %vm369 = vcmp.eq.s32.totalorder %v367, %v238
        %vm370 = vcmp.eq.s32.totalorder %v367, %v239
        %v371 = vsel %vm368, 1, 0
        %v372 = vsel %vm369, 1, 0
        %v373 = vsel %vm370, 1, 0
        %v374 = vadd.s32 %v360, %v371
        %v375 = vadd.s32 %v361, %v372
        %v376 = vadd.s32 %v362, %v373
        %v377 = vcvt.s32.f32 %v374
        %v378 = vcvt.s32.f32 %v375
        %v379 = vcvt.s32.f32 %v376
        %v380 = vld [vmem:[%s212 + $0xa] sm:$0x1]
        %v381 = vlaneseq
        %v382 = vshrl.u32 %v381, 7
        %v383 = vsub.s32 0, %v382
        %v384 = vrot.slane %v380, %v383
        %vm385 = vcmp.eq.s32.totalorder %v384, %v237
        %vm386 = vcmp.eq.s32.totalorder %v384, %v238
        %vm387 = vcmp.eq.s32.totalorder %v384, %v239
        %v388 = vsel %vm385, 1, 0
        %v389 = vsel %vm386, 1, 0
        %v390 = vsel %vm387, 1, 0
        %v391 = vld [vmem:[%s212 + $0xb] sm:$0x1]
        %v392 = vlaneseq
        %v393 = vshrl.u32 %v392, 7
        %v394 = vsub.s32 0, %v393
        %v395 = vrot.slane %v391, %v394
        %vm396 = vcmp.eq.s32.totalorder %v395, %v237
        %vm397 = vcmp.eq.s32.totalorder %v395, %v238
        %vm398 = vcmp.eq.s32.totalorder %v395, %v239
        %v399 = vsel %vm396, 1, 0
        %v400 = vsel %vm397, 1, 0
        %v401 = vsel %vm398, 1, 0
        %v402 = vadd.s32 %v388, %v399
        %v403 = vadd.s32 %v389, %v400
        %v404 = vadd.s32 %v390, %v401
        %v405 = vld [vmem:[%s212 + $0xc] sm:$0x1]
        %v406 = vlaneseq
        %v407 = vshrl.u32 %v406, 7
        %v408 = vsub.s32 0, %v407
        %v409 = vrot.slane %v405, %v408
        %vm410 = vcmp.eq.s32.totalorder %v409, %v237
        %vm411 = vcmp.eq.s32.totalorder %v409, %v238
        %vm412 = vcmp.eq.s32.totalorder %v409, %v239
        %v413 = vsel %vm410, 1, 0
        %v414 = vsel %vm411, 1, 0
        %v415 = vsel %vm412, 1, 0
        %v416 = vadd.s32 %v402, %v413
        %v417 = vadd.s32 %v403, %v414
        %v418 = vadd.s32 %v404, %v415
        %v419 = vld [vmem:[%s212 + $0xd] sm:$0x1]
        %v420 = vlaneseq
        %v421 = vshrl.u32 %v420, 7
        %v422 = vsub.s32 0, %v421
        %v423 = vrot.slane %v419, %v422
        %vm424 = vcmp.eq.s32.totalorder %v423, %v237
        %vm425 = vcmp.eq.s32.totalorder %v423, %v238
        %vm426 = vcmp.eq.s32.totalorder %v423, %v239
        %v427 = vsel %vm424, 1, 0
        %v428 = vsel %vm425, 1, 0
        %v429 = vsel %vm426, 1, 0
        %v430 = vadd.s32 %v416, %v427
        %v431 = vadd.s32 %v417, %v428
        %v432 = vadd.s32 %v418, %v429
        %v433 = vld [vmem:[%s212 + $0xe] sm:$0x1]
        %v434 = vlaneseq
        %v435 = vshrl.u32 %v434, 7
        %v436 = vsub.s32 0, %v435
        %v437 = vrot.slane %v433, %v436
        %vm438 = vcmp.eq.s32.totalorder %v437, %v237
        %vm439 = vcmp.eq.s32.totalorder %v437, %v238
        %vm440 = vcmp.eq.s32.totalorder %v437, %v239
        %v441 = vsel %vm438, 1, 0
        %v442 = vsel %vm439, 1, 0
        %v443 = vsel %vm440, 1, 0
        %v444 = vadd.s32 %v430, %v441
        %v445 = vadd.s32 %v431, %v442
        %v446 = vadd.s32 %v432, %v443
        %v447 = vld [vmem:[%s212 + $0xf] sm:$0x1]
        %v448 = vlaneseq
        %v449 = vshrl.u32 %v448, 7
        %v450 = vsub.s32 0, %v449
        %v451 = vrot.slane %v447, %v450
        %vm452 = vcmp.eq.s32.totalorder %v451, %v237
        %vm453 = vcmp.eq.s32.totalorder %v451, %v238
        %vm454 = vcmp.eq.s32.totalorder %v451, %v239
        %v455 = vsel %vm452, 1, 0
        %v456 = vsel %vm453, 1, 0
        %v457 = vsel %vm454, 1, 0
        %v458 = vadd.s32 %v444, %v455
        %v459 = vadd.s32 %v445, %v456
        %v460 = vadd.s32 %v446, %v457
        %v461 = vld [vmem:[%s212 + $0x10] sm:$0x1]
        %v462 = vlaneseq
        %v463 = vshrl.u32 %v462, 7
        %v464 = vsub.s32 0, %v463
        %v465 = vrot.slane %v461, %v464
        %vm466 = vcmp.eq.s32.totalorder %v465, %v237
        %vm467 = vcmp.eq.s32.totalorder %v465, %v238
        %vm468 = vcmp.eq.s32.totalorder %v465, %v239
        %v469 = vsel %vm466, 1, 0
        %v470 = vsel %vm467, 1, 0
        %v471 = vsel %vm468, 1, 0
        %v472 = vadd.s32 %v458, %v469
        %v473 = vadd.s32 %v459, %v470
        %v474 = vadd.s32 %v460, %v471
        %v475 = vld [vmem:[%s212 + $0x11] sm:$0x1]
        %v476 = vlaneseq
        %v477 = vshrl.u32 %v476, 7
        %v478 = vsub.s32 0, %v477
        %v479 = vrot.slane %v475, %v478
        %vm480 = vcmp.eq.s32.totalorder %v479, %v237
        %vm481 = vcmp.eq.s32.totalorder %v479, %v238
        %vm482 = vcmp.eq.s32.totalorder %v479, %v239
        %v483 = vsel %vm480, 1, 0
        %v484 = vsel %vm481, 1, 0
        %v485 = vsel %vm482, 1, 0
        %v486 = vadd.s32 %v472, %v483
        %v487 = vadd.s32 %v473, %v484
        %v488 = vadd.s32 %v474, %v485
        %v489 = vcvt.s32.f32 %v486
        %v490 = vcvt.s32.f32 %v487
        %v491 = vcvt.s32.f32 %v488
        %v492 = vld [vmem:[%s1] sm:$0xff]
        %v493 = vld [vmem:[%s1 + $0x8] sm:$0xff]
        %v494 = vld [vmem:[%s1 + $0x10] sm:$0xff]
        %v495 = vld [vmem:[%s1 + $0x18] sm:$0xff]
        %v496 = vld [vmem:[%s1 + $0x20] sm:$0xff]
        %v497 = vld [vmem:[%s1 + $0x28] sm:$0xff]
        %v498 = vld [vmem:[%s1 + $0x30] sm:$0xff]
        %v499 = vld [vmem:[%s1 + $0x38] sm:$0xff]
        %vm500 = vcmask 195584
        %v502 = vsel %vm500, %v492, 0
        %v505 = vsel %vm500, %v493, 0
        %v508 = vsel %vm500, %v494, 0
        %v511 = vsel %vm500, %v495, 0
        %v514 = vsel %vm500, %v496, 0
        %v517 = vsel %vm500, %v497, 0
        %v520 = vsel %vm500, %v498, 0
        %v523 = vsel %vm500, %v499, 0
        %525 = vmatprep.subr.mxu0 0.0
        %526 = vmatpush1.msra.mxu0 %v265
        %527 = vmatprep.subr.mxu0 0.0
        %528 = vmatpush1.msra.mxu0 %v266
        %529 = vmatprep.subr.mxu0 0.0
        %530 = vmatpush1.msra.mxu0 %v267
        %531 = vmatprep.subr.mxu0 0.0
        %532 = vmatpush1.msra.mxu0 0.0
        %533 = vmatprep.subr.mxu0 0.0
        %534 = vmatpush1.msra.mxu0 0.0
        %535 = vmatprep.subr.mxu0 0.0
        %536 = vmatpush1.msra.mxu0 0.0
        %537 = vmatprep.subr.mxu0 0.0
        %538 = vmatpush1.msra.mxu0 0.0
        %539 = vmatprep.subr.mxu0 0.0
        %540 = vmatpush1.msra.mxu0 0.0
        %541 = vmatprep.subr.mxu0 0.0
        %542 = vmatpush1.msra.mxu0 0.0
        %543 = vmatprep.subr.mxu0 0.0
        %544 = vmatpush1.msra.mxu0 0.0
        %545 = vmatprep.subr.mxu0 0.0
        %546 = vmatpush1.msra.mxu0 0.0
        %547 = vmatprep.subr.mxu0 0.0
        %548 = vmatpush1.msra.mxu0 0.0
        %549 = vmatprep.subr.mxu0 0.0
        %550 = vmatpush1.msra.mxu0 0.0
        %551 = vmatprep.subr.mxu0 0.0
        %552 = vmatpush1.msra.mxu0 0.0
        %553 = vmatprep.subr.mxu0 0.0
        %554 = vmatpush1.msra.mxu0 0.0
        %555 = vmatprep.subr.mxu0 0.0
        %556 = vmatpush1.msra.mxu0 0.0
        %557 = vmatprep.subr.mxu0 0.0
        %558 = vmatpush1.msra.mxu0 0.0
        %559 = vmatprep.subr.mxu0 0.0
        %560 = vmatpush1.msra.mxu0 0.0
        %561 = vmatprep.subr.mxu0 0.0
        %562 = vmatpush1.msra.mxu0 0.0
        %563 = vmatprep.subr.mxu0 0.0
        %564 = vmatpush1.msra.mxu0 0.0
        %565 = vmatprep.subr.mxu0 0.0
        %566 = vmatpush1.msra.mxu0 0.0
        %567 = vmatprep.subr.mxu0 0.0
        %568 = vmatpush1.msra.mxu0 0.0
        %569 = vmatprep.subr.mxu0 0.0
        %570 = vmatpush1.msra.mxu0 0.0
        %571 = vmatprep.subr.mxu0 0.0
        %572 = vmatpush1.msra.mxu0 0.0
        %573 = vmatprep.subr.mxu0 0.0
        %574 = vmatpush1.msra.mxu0 0.0
        %575 = vmatprep.subr.mxu0 0.0
        %576 = vmatpush1.msra.mxu0 0.0
        %577 = vmatprep.subr.mxu0 0.0
        %578 = vmatpush1.msra.mxu0 0.0
        %579 = vmatprep.subr.mxu0 0.0
        %580 = vmatpush1.msra.mxu0 0.0
        %581 = vmatprep.subr.mxu0 0.0
        %582 = vmatpush1.msra.mxu0 0.0
        %583 = vmatprep.subr.mxu0 0.0
        %584 = vmatpush1.msra.mxu0 0.0
        %585 = vmatprep.subr.mxu0 0.0
        %586 = vmatpush1.msra.mxu0 0.0
        %587 = vmatprep.subr.mxu0 0.0
        %588 = vmatpush1.msra.mxu0 0.0
        %589 = vmatprep.mubr.f32.mxu0 0.0
        %590 = vmatmul.mubr.f32.gmra.mrb[0].mxu0 %v502
        %v591 = vpop.f32.mrb[0].mxu0
        %v592 = vadd.f32 0.0, %v591
        %v593 = vpop.f32.mrb[0].mxu0
        %594 = vmatprep.mubr.f32.mxu0 0.0
        %595 = vmatmul.mubr.f32.gmra.mrb[0].mxu0 %v505
        %v596 = vpop.f32.mrb[0].mxu0
        %v597 = vadd.f32 0.0, %v596
        %v598 = vpop.f32.mrb[0].mxu0
        %599 = vmatprep.mubr.f32.mxu0 0.0
        %600 = vmatmul.mubr.f32.gmra.mrb[0].mxu0 %v508
        %v601 = vpop.f32.mrb[0].mxu0
        %v602 = vadd.f32 0.0, %v601
        %v603 = vpop.f32.mrb[0].mxu0
        %604 = vmatprep.mubr.f32.mxu0 0.0
        %605 = vmatmul.mubr.f32.gmra.mrb[0].mxu0 %v511
        %v606 = vpop.f32.mrb[0].mxu0
        %v607 = vadd.f32 0.0, %v606
        %v608 = vpop.f32.mrb[0].mxu0
        %609 = vmatprep.mubr.f32.mxu0 0.0
        %610 = vmatmul.mubr.f32.gmra.mrb[0].mxu0 %v514
        %v611 = vpop.f32.mrb[0].mxu0
        %v612 = vadd.f32 0.0, %v611
        %v613 = vpop.f32.mrb[0].mxu0
        %614 = vmatprep.mubr.f32.mxu0 0.0
        %615 = vmatmul.mubr.f32.gmra.mrb[0].mxu0 %v517
        %v616 = vpop.f32.mrb[0].mxu0
        %v617 = vadd.f32 0.0, %v616
        %v618 = vpop.f32.mrb[0].mxu0
        %619 = vmatprep.mubr.f32.mxu0 0.0
        %620 = vmatmul.mubr.f32.gmra.mrb[0].mxu0 %v520
        %v621 = vpop.f32.mrb[0].mxu0
        %v622 = vadd.f32 0.0, %v621
        %v623 = vpop.f32.mrb[0].mxu0
        %624 = vmatprep.mubr.f32.mxu0 0.0
        %625 = vmatmul.mubr.f32.gmra.mrb[0].mxu0 %v523
        %v626 = vpop.f32.mrb[0].mxu0
        %v627 = vadd.f32 0.0, %v626
        %v628 = vpop.f32.mrb[0].mxu0
        %629 = vdwg.mxu0
        %v630 = vld [vmem:[%s2] sm:$0xff]
        %v631 = vld [vmem:[%s2 + $0x8] sm:$0xff]
        %v632 = vld [vmem:[%s2 + $0x10] sm:$0xff]
        %v633 = vld [vmem:[%s2 + $0x18] sm:$0xff]
        %v634 = vld [vmem:[%s2 + $0x20] sm:$0xff]
        %v635 = vld [vmem:[%s2 + $0x28] sm:$0xff]
        %v636 = vld [vmem:[%s2 + $0x30] sm:$0xff]
        %v637 = vld [vmem:[%s2 + $0x38] sm:$0xff]
        %v639 = vsel %vm500, %v630, 0
        %v642 = vsel %vm500, %v631, 0
        %v645 = vsel %vm500, %v632, 0
        %v648 = vsel %vm500, %v633, 0
        %v651 = vsel %vm500, %v634, 0
        %v654 = vsel %vm500, %v635, 0
        %v657 = vsel %vm500, %v636, 0
        %v660 = vsel %vm500, %v637, 0
        %662 = vmatprep.subr.mxu0 0.0
        %663 = vmatpush1.msra.mxu0 %v489
        %664 = vmatprep.subr.mxu0 0.0
        %665 = vmatpush1.msra.mxu0 %v490
        %666 = vmatprep.subr.mxu0 0.0
        %667 = vmatpush1.msra.mxu0 %v491
        %668 = vmatprep.subr.mxu0 0.0
        %669 = vmatpush1.msra.mxu0 0.0
        %670 = vmatprep.subr.mxu0 0.0
        %671 = vmatpush1.msra.mxu0 0.0
        %672 = vmatprep.subr.mxu0 0.0
        %673 = vmatpush1.msra.mxu0 0.0
        %674 = vmatprep.subr.mxu0 0.0
        %675 = vmatpush1.msra.mxu0 0.0
        %676 = vmatprep.subr.mxu0 0.0
        %677 = vmatpush1.msra.mxu0 0.0
        %678 = vmatprep.subr.mxu0 0.0
        %679 = vmatpush1.msra.mxu0 0.0
        %680 = vmatprep.subr.mxu0 0.0
        %681 = vmatpush1.msra.mxu0 0.0
        %682 = vmatprep.subr.mxu0 0.0
        %683 = vmatpush1.msra.mxu0 0.0
        %684 = vmatprep.subr.mxu0 0.0
        %685 = vmatpush1.msra.mxu0 0.0
        %686 = vmatprep.subr.mxu0 0.0
        %687 = vmatpush1.msra.mxu0 0.0
        %688 = vmatprep.subr.mxu0 0.0
        %689 = vmatpush1.msra.mxu0 0.0
        %690 = vmatprep.subr.mxu0 0.0
        %691 = vmatpush1.msra.mxu0 0.0
        %692 = vmatprep.subr.mxu0 0.0
        %693 = vmatpush1.msra.mxu0 0.0
        %694 = vmatprep.subr.mxu0 0.0
        %695 = vmatpush1.msra.mxu0 0.0
        %696 = vmatprep.subr.mxu0 0.0
        %697 = vmatpush1.msra.mxu0 0.0
        %698 = vmatprep.subr.mxu0 0.0
        %699 = vmatpush1.msra.mxu0 0.0
        %700 = vmatprep.subr.mxu0 0.0
        %701 = vmatpush1.msra.mxu0 0.0
        %702 = vmatprep.subr.mxu0 0.0
        %703 = vmatpush1.msra.mxu0 0.0
        %704 = vmatprep.subr.mxu0 0.0
        %705 = vmatpush1.msra.mxu0 0.0
        %706 = vmatprep.subr.mxu0 0.0
        %707 = vmatpush1.msra.mxu0 0.0
        %708 = vmatprep.subr.mxu0 0.0
        %709 = vmatpush1.msra.mxu0 0.0
        %710 = vmatprep.subr.mxu0 0.0
        %711 = vmatpush1.msra.mxu0 0.0
        %712 = vmatprep.subr.mxu0 0.0
        %713 = vmatpush1.msra.mxu0 0.0
        %714 = vmatprep.subr.mxu0 0.0
        %715 = vmatpush1.msra.mxu0 0.0
        %716 = vmatprep.subr.mxu0 0.0
        %717 = vmatpush1.msra.mxu0 0.0
        %718 = vmatprep.subr.mxu0 0.0
        %719 = vmatpush1.msra.mxu0 0.0
        %720 = vmatprep.subr.mxu0 0.0
        %721 = vmatpush1.msra.mxu0 0.0
        %722 = vmatprep.subr.mxu0 0.0
        %723 = vmatpush1.msra.mxu0 0.0
        %724 = vmatprep.subr.mxu0 0.0
        %725 = vmatpush1.msra.mxu0 0.0
        %726 = vmatprep.mubr.f32.mxu0 0.0
        %727 = vmatmul.mubr.f32.gmra.mrb[0].mxu0 %v639
        %v728 = vpop.f32.mrb[0].mxu0
        %v729 = vadd.f32 0.0, %v728
        %v730 = vpop.f32.mrb[0].mxu0
        %731 = vmatprep.mubr.f32.mxu0 0.0
        %732 = vmatmul.mubr.f32.gmra.mrb[0].mxu0 %v642
        %v733 = vpop.f32.mrb[0].mxu0
        %v734 = vadd.f32 0.0, %v733
        %v735 = vpop.f32.mrb[0].mxu0
        %736 = vmatprep.mubr.f32.mxu0 0.0
        %737 = vmatmul.mubr.f32.gmra.mrb[0].mxu0 %v645
        %v738 = vpop.f32.mrb[0].mxu0
        %v739 = vadd.f32 0.0, %v738
        %v740 = vpop.f32.mrb[0].mxu0
        %741 = vmatprep.mubr.f32.mxu0 0.0
        %742 = vmatmul.mubr.f32.gmra.mrb[0].mxu0 %v648
        %v743 = vpop.f32.mrb[0].mxu0
        %v744 = vadd.f32 0.0, %v743
        %v745 = vpop.f32.mrb[0].mxu0
        %746 = vmatprep.mubr.f32.mxu0 0.0
        %747 = vmatmul.mubr.f32.gmra.mrb[0].mxu0 %v651
        %v748 = vpop.f32.mrb[0].mxu0
        %v749 = vadd.f32 0.0, %v748
        %v750 = vpop.f32.mrb[0].mxu0
        %751 = vmatprep.mubr.f32.mxu0 0.0
        %752 = vmatmul.mubr.f32.gmra.mrb[0].mxu0 %v654
        %v753 = vpop.f32.mrb[0].mxu0
        %v754 = vadd.f32 0.0, %v753
        %v755 = vpop.f32.mrb[0].mxu0
        %756 = vmatprep.mubr.f32.mxu0 0.0
        %757 = vmatmul.mubr.f32.gmra.mrb[0].mxu0 %v657
        %v758 = vpop.f32.mrb[0].mxu0
        %v759 = vadd.f32 0.0, %v758
        %v760 = vpop.f32.mrb[0].mxu0
        %761 = vmatprep.mubr.f32.mxu0 0.0
        %762 = vmatmul.mubr.f32.gmra.mrb[0].mxu0 %v660
        %v763 = vpop.f32.mrb[0].mxu0
        %v764 = vadd.f32 0.0, %v763
        %v765 = vpop.f32.mrb[0].mxu0
        %766 = vdwg.mxu0
        %v767 = vld [vmem:[%s3] sm:$0xff]
        %v768 = vld [vmem:[%s3 + $0x8] sm:$0xff]
        %v769 = vld [vmem:[%s3 + $0x10] sm:$0xff]
        %v770 = vld [vmem:[%s3 + $0x18] sm:$0xff]
        %v772 = vsel %vm500, %v767, 0
        %v775 = vsel %vm500, %v768, 0
        %v778 = vsel %vm500, %v769, 0
        %v781 = vsel %vm500, %v770, 0
        %783 = vmatprep.subr.mxu0 0.0
        %784 = vmatpush1.msra.mxu0 %v377
        %785 = vmatprep.subr.mxu0 0.0
        %786 = vmatpush1.msra.mxu0 %v378
        %787 = vmatprep.subr.mxu0 0.0
        %788 = vmatpush1.msra.mxu0 %v379
        %789 = vmatprep.subr.mxu0 0.0
        %790 = vmatpush1.msra.mxu0 0.0
        %791 = vmatprep.subr.mxu0 0.0
        %792 = vmatpush1.msra.mxu0 0.0
        %793 = vmatprep.subr.mxu0 0.0
        %794 = vmatpush1.msra.mxu0 0.0
        %795 = vmatprep.subr.mxu0 0.0
        %796 = vmatpush1.msra.mxu0 0.0
        %797 = vmatprep.subr.mxu0 0.0
        %798 = vmatpush1.msra.mxu0 0.0
        %799 = vmatprep.subr.mxu0 0.0
        %800 = vmatpush1.msra.mxu0 0.0
        %801 = vmatprep.subr.mxu0 0.0
        %802 = vmatpush1.msra.mxu0 0.0
        %803 = vmatprep.subr.mxu0 0.0
        %804 = vmatpush1.msra.mxu0 0.0
        %805 = vmatprep.subr.mxu0 0.0
        %806 = vmatpush1.msra.mxu0 0.0
        %807 = vmatprep.subr.mxu0 0.0
        %808 = vmatpush1.msra.mxu0 0.0
        %809 = vmatprep.subr.mxu0 0.0
        %810 = vmatpush1.msra.mxu0 0.0
        %811 = vmatprep.subr.mxu0 0.0
        %812 = vmatpush1.msra.mxu0 0.0
        %813 = vmatprep.subr.mxu0 0.0
        %814 = vmatpush1.msra.mxu0 0.0
        %815 = vmatprep.subr.mxu0 0.0
        %816 = vmatpush1.msra.mxu0 0.0
        %817 = vmatprep.subr.mxu0 0.0
        %818 = vmatpush1.msra.mxu0 0.0
        %819 = vmatprep.subr.mxu0 0.0
        %820 = vmatpush1.msra.mxu0 0.0
        %821 = vmatprep.subr.mxu0 0.0
        %822 = vmatpush1.msra.mxu0 0.0
        %823 = vmatprep.subr.mxu0 0.0
        %824 = vmatpush1.msra.mxu0 0.0
        %825 = vmatprep.subr.mxu0 0.0
        %826 = vmatpush1.msra.mxu0 0.0
        %827 = vmatprep.subr.mxu0 0.0
        %828 = vmatpush1.msra.mxu0 0.0
        %829 = vmatprep.subr.mxu0 0.0
        %830 = vmatpush1.msra.mxu0 0.0
        %831 = vmatprep.subr.mxu0 0.0
        %832 = vmatpush1.msra.mxu0 0.0
        %833 = vmatprep.subr.mxu0 0.0
        %834 = vmatpush1.msra.mxu0 0.0
        %835 = vmatprep.subr.mxu0 0.0
        %836 = vmatpush1.msra.mxu0 0.0
        %837 = vmatprep.subr.mxu0 0.0
        %838 = vmatpush1.msra.mxu0 0.0
        %839 = vmatprep.subr.mxu0 0.0
        %840 = vmatpush1.msra.mxu0 0.0
        %841 = vmatprep.subr.mxu0 0.0
        %842 = vmatpush1.msra.mxu0 0.0
        %843 = vmatprep.subr.mxu0 0.0
        %844 = vmatpush1.msra.mxu0 0.0
        %845 = vmatprep.subr.mxu0 0.0
        %846 = vmatpush1.msra.mxu0 0.0
        %847 = vmatprep.mubr.f32.mxu0 0.0
        %848 = vmatmul.mubr.f32.gmra.mrb[0].mxu0 %v772
        %v849 = vpop.f32.mrb[0].mxu0
        %v850 = vadd.f32 0.0, %v849
        %v851 = vpop.f32.mrb[0].mxu0
        %852 = vmatprep.mubr.f32.mxu0 0.0
        %853 = vmatmul.mubr.f32.gmra.mrb[0].mxu0 %v775
        %v854 = vpop.f32.mrb[0].mxu0
        %v855 = vadd.f32 0.0, %v854
        %v856 = vpop.f32.mrb[0].mxu0
        %857 = vmatprep.mubr.f32.mxu0 0.0
        %858 = vmatmul.mubr.f32.gmra.mrb[0].mxu0 %v778
        %v859 = vpop.f32.mrb[0].mxu0
        %v860 = vadd.f32 0.0, %v859
        %v861 = vpop.f32.mrb[0].mxu0
        %862 = vmatprep.mubr.f32.mxu0 0.0
        %863 = vmatmul.mubr.f32.gmra.mrb[0].mxu0 %v781
        %v864 = vpop.f32.mrb[0].mxu0
        %v865 = vadd.f32 0.0, %v864
        %v866 = vpop.f32.mrb[0].mxu0
        %867 = vdwg.mxu0
        %v868 = vadd.f32 %v592, %v729
        %v869 = vadd.f32 %v597, %v734
        %v870 = vadd.f32 %v602, %v739
        %v871 = vadd.f32 %v607, %v744
        %v872 = vadd.f32 %v612, %v749
        %v873 = vadd.f32 %v617, %v754
        %v874 = vadd.f32 %v622, %v759
        %v875 = vadd.f32 %v627, %v764
        %v876 = vmul.f32 %v868, %v868
        %v877 = vmul.f32 %v869, %v869
        %v878 = vmul.f32 %v870, %v870
        %v879 = vmul.f32 %v871, %v871
        %v880 = vsub.f32 %v876, %v872
        %v881 = vsub.f32 %v877, %v873
        %v882 = vsub.f32 %v878, %v874
        %v883 = vsub.f32 %v879, %v875
        %v884 = vmul.f32 %v880, 0.5
        %v885 = vmul.f32 %v881, 0.5
        %v886 = vmul.f32 %v882, 0.5
        %v887 = vmul.f32 %v883, 0.5
        %v888 = vmul.f32 %v850, %v729
        %v889 = vmul.f32 %v855, %v734
        %v890 = vmul.f32 %v860, %v739
        %v891 = vmul.f32 %v865, %v744
        %v892 = vadd.f32 %v884, %v888
        %v893 = vadd.f32 %v885, %v889
        %v894 = vadd.f32 %v886, %v890
        %v895 = vadd.f32 %v887, %v891
        %v896 = vadd.f32 %v892, %v893
        %v897 = vadd.f32 %v896, %v894
        %v898 = vadd.f32 %v897, %v895
        %v899 = vrot.slane %v898, 4
        %v900 = vadd.f32 %v898, %v899
        %v901 = vrot.slane %v900, 2
        %v902 = vadd.f32 %v900, %v901
        %v903 = vrot.slane %v902, 1
        %v904 = vadd.f32 %v902, %v903
        %905 = vst [vmem:[%s235] sm:$0x1] %v904
        %p906 = scmp.lt.s32.totalorder %s15, 1
        %s907 = scalar_select %p906, %s15, 1
        %s908 = scalar_lea.vmem %s4, %s907
        // Predicated region
        $region75: #{fm_forward.1} parent=69 // pred_check
          %p909 = pneg %p122
        $region76: #{fm_forward.1} parent=69 // pred_check_branch
          %911 = sbr.rel (%p909) target = $region78
        $region77: #{fm_forward.1} parent=69 // pred_region
          _
        $region78: #{fm_forward.1} parent=69 // pred_fallthru
          _
      $region70: #{fm_forward.1} parent=5 // pred_fallthru
        _
      %p912 = scmp.le.s32.totalorder 2, %s10
      // Predicated region
      $region79: #{fm_forward.1} parent=5 // pred_check
        %p913 = pneg %p912
      $region80: #{fm_forward.1} parent=5 // pred_check_branch
        %915 = sbr.rel (%p913) target = $region82
      $region81: #{fm_forward.1} parent=5 // pred_region
        %s916 = ssub.s32 %s10, 2
        // Predicated region
        $region83: #{fm_forward.1} parent=81 // pred_check
          %p917 = pneg %p128
        $region84: #{fm_forward.1} parent=81 // pred_check_branch
          %919 = sbr.rel (%p917) target = $region86
        $region85: #{fm_forward.1} parent=81 // pred_region
          %p920 = scmp.lt.s32.totalorder %s16, 1
          %s921 = scalar_select %p920, %s16, 1
          %s922 = scalar_lea.vmem %s4, %s921
        $region86: #{fm_forward.1} parent=81 // pred_fallthru
          _
      $region82: #{fm_forward.1} parent=5 // pred_fallthru
        _
    $region6: #{fm_forward.1} parent=1 // loop_footer
      %s14 = sadd.s32 1, %s10
    $region7: #{fm_forward.1} parent=1 // loop_footer_branch
      %9 = sbr.rel target = $region3
    $region8: #{fm_forward.1} parent=1 // loop_exit
      _

</llo_original>
